<compile_context>
chip_gen: v6e
topology: v6e:2x2x1
jax: 0.10.0
libtpu: 0.0.40
codegen_flags: <defaults>
</compile_context>

<pallas_src>
import math
import jax
import jax.numpy as jnp
from jax.experimental import pallas as pl
from jax.experimental.pallas import tpu as pltpu


_ACTS = {
    "relu": lambda x: jnp.maximum(x, 0.0),
    "sigmoid": jax.nn.sigmoid,
    "tanh": jnp.tanh,
    None: lambda x: x,
}


def _make_mlp_kernel(activations):
    """Fused MLP kernel.

    Kernel args: x_ref, w0, b0, ..., w_{L-1}, b_{L-1}, out_ref.
    Hidden weights w_i are bf16 (in, out); the last weight is f32 (1, units[-1]).
    """
    n_layers = len(activations)

    def kernel(x_ref, *refs):
        out_ref = refs[-1]
        param_refs = refs[:-1]
        assert len(param_refs) == 2 * n_layers
        h = x_ref[...]  # (TB, in) float32

        # Hidden layers: bf16 operands on the MXU, f32 accumulation, f32 VPU math.
        for i in range(n_layers - 1):
            w = param_refs[2 * i][...]        # bf16 (in, out)
            b = param_refs[2 * i + 1][...]    # f32  (1, out)
            h = jnp.dot(h.astype(jnp.bfloat16), w,
                        preferred_element_type=jnp.float32) + b
            h = _ACTS[activations[i]](h)

        # Final Linear(units[-1], 1): N=1 matmul wastes 127/128 MXU lanes, so do
        # it as a VPU multiply + cross-lane (XLU) reduction instead.
        w_last = param_refs[-2][...]          # f32 (1, units[-1])
        b_last = param_refs[-1][...]          # f32 (1, 1)
        y = jnp.sum(h * w_last, axis=-1, keepdims=True) + b_last
        y = _ACTS[activations[-1]](y)
        out_ref[...] = y.astype(out_ref.dtype)

    return kernel


def init_net_params(key, input_size, layers):
    """Deterministic init mirroring torch.nn.Linear default (uniform ±1/sqrt(fan_in)).

    Returns a flat list [w0, b0, w1, b1, ...] with w_i of shape (in, out) and
    b_i of shape (1, out), plus the per-layer activations (None for the final
    Linear(units[-1], 1))."""
    dims = []
    acts = []
    prev = input_size
    for layer in layers:
        dims.append((prev, layer["units"]))
        acts.append(layer["activation"])
        prev = layer["units"]
    dims.append((prev, 1))   # final Linear(units[-1], 1), no activation
    acts.append(None)

    params = []
    for (fan_in, fan_out) in dims:
        key, kw, kb = jax.random.split(key, 3)
        bound = 1.0 / math.sqrt(fan_in)
        w = jax.random.uniform(kw, (fan_in, fan_out), jnp.float32, -bound, bound)
        b = jax.random.uniform(kb, (1, fan_out), jnp.float32, -bound, bound)
        params.extend([w, b])
    return params, acts


def net_forward(x, params, activations, *, block_batch=256):
    """Run the fused MLP Pallas kernel.  x: (batch, input_size) float32."""
    batch, in_dim = x.shape
    n_layers = len(activations)

    # Kernel-friendly parameter layouts (all reshaping/casting is wrapper-side):
    #  - hidden weights -> bf16 (halves weight DMA bytes, feeds MXU bf16 path)
    #  - final weight   -> transposed to lane-dense (1, units[-1]) f32 for VPU path
    kparams = []
    for i in range(n_layers - 1):
        kparams.append(params[2 * i].astype(jnp.bfloat16))
        kparams.append(params[2 * i + 1])
    kparams.append(params[-2].T)   # (1, units[-1]) f32
    kparams.append(params[-1])     # (1, 1) f32

    # Batch tile: as large as reasonable, multiple of 8 (sublane rule) unless it
    # covers the whole (small) batch.  Activations/weights are tiny, so the
    # tile cost is dominated by the x/out DMA only.
    tb = min(block_batch, batch)
    if tb < batch:
        tb = max(8, (tb // 8) * 8)
    grid = (pl.cdiv(batch, tb),)

    x_spec = pl.BlockSpec((tb, in_dim), lambda i: (i, 0))
    out_spec = pl.BlockSpec((tb, 1), lambda i: (i, 0))
    # Weights/biases: whole-array blocks with a constant block index -> they stay
    # resident in VMEM across all batch-grid steps (no re-DMA).
    param_specs = [pl.BlockSpec(p.shape, lambda i: (0, 0)) for p in kparams]

    # Advisory cost estimate so XLA can overlap surrounding work.
    flops = 2 * batch * sum(params[2 * i].shape[0] * params[2 * i].shape[1]
                            for i in range(n_layers))
    transcendentals = batch * sum(
        params[2 * i].shape[1]
        for i in range(n_layers) if activations[i] in ("sigmoid", "tanh"))
    bytes_accessed = x.size * x.dtype.itemsize + batch * 4 + sum(
        p.size * p.dtype.itemsize for p in kparams)
    cost = pl.CostEstimate(flops=flops, transcendentals=transcendentals,
                           bytes_accessed=bytes_accessed)

    kernel = _make_mlp_kernel(activations)
    return pl.pallas_call(
        kernel,
        out_shape=jax.ShapeDtypeStruct((batch, 1), jnp.float32),
        grid=grid,
        in_specs=[x_spec] + param_specs,
        out_specs=out_spec,
        compiler_params=pltpu.CompilerParams(
            dimension_semantics=("parallel",),       # megacore split on v7x
            vmem_limit_bytes=32 * 1024 * 1024,       # safe on v5e/v6e/v7x
        ),
        cost_estimate=cost,
    )(x, *kparams)


if __name__ == "__main__":
    # Small, concrete instantiation of Net(input_size, layers)
    input_size = 32
    layers = [
        {"units": 64, "activation": "relu"},
        {"units": 32, "activation": "tanh"},
        {"units": 16, "activation": "sigmoid"},
    ]
    batch = 8

    key = jax.random.PRNGKey(0)
    key, kx = jax.random.split(key)
    x = jax.random.normal(kx, (batch, input_size), jnp.float32)

    params, activations = init_net_params(key, input_size, layers)

    out = net_forward(x, params, activations)
    out = jax.block_until_ready(out)
    assert out.shape == (batch, 1), out.shape
    assert out.dtype == jnp.float32, out.dtype
    assert bool(jnp.all(jnp.isfinite(out)))
    print("KERNEL_OK")
</pallas_src>

<mosaic_0001>
module attributes {stable_mosaic.version = 11 : i64} {
  func.func @kernel(%arg0: i32, %arg1: memref<8x32xf32, #tpu.memory_space<vmem>>, %arg2: memref<32x64xbf16, #tpu.memory_space<vmem>>, %arg3: memref<1x64xf32, #tpu.memory_space<vmem>>, %arg4: memref<64x32xbf16, #tpu.memory_space<vmem>>, %arg5: memref<1x32xf32, #tpu.memory_space<vmem>>, %arg6: memref<32x16xbf16, #tpu.memory_space<vmem>>, %arg7: memref<1x16xf32, #tpu.memory_space<vmem>>, %arg8: memref<1x16xf32, #tpu.memory_space<vmem>>, %arg9: memref<1x1xf32, #tpu.memory_space<vmem>>, %arg10: memref<8x1xf32, #tpu.memory_space<vmem>>) attributes {dimension_semantics = [#tpu.dimension_semantics<parallel>], iteration_bounds = array<i64: 1>, scalar_prefetch = 0 : i64, scratch_operands = 0 : i64, tpu.core_type = #tpu.core_type<tc>, window_params = [{transform_indices = @transform_0, window_bounds = array<i64: 8, 32>}, {pipeline_mode = #tpu.pipeline_mode<synchronous>, transform_indices = @transform_1, window_bounds = array<i64: 32, 64>}, {pipeline_mode = #tpu.pipeline_mode<synchronous>, transform_indices = @transform_2, window_bounds = array<i64: 1, 64>}, {pipeline_mode = #tpu.pipeline_mode<synchronous>, transform_indices = @transform_3, window_bounds = array<i64: 64, 32>}, {pipeline_mode = #tpu.pipeline_mode<synchronous>, transform_indices = @transform_4, window_bounds = array<i64: 1, 32>}, {pipeline_mode = #tpu.pipeline_mode<synchronous>, transform_indices = @transform_5, window_bounds = array<i64: 32, 16>}, {pipeline_mode = #tpu.pipeline_mode<synchronous>, transform_indices = @transform_6, window_bounds = array<i64: 1, 16>}, {pipeline_mode = #tpu.pipeline_mode<synchronous>, transform_indices = @transform_7, window_bounds = array<i64: 1, 16>}, {pipeline_mode = #tpu.pipeline_mode<synchronous>, transform_indices = @transform_8, window_bounds = array<i64: 1, 1>}, {transform_indices = @transform_9, window_bounds = array<i64: 8, 1>}]} {
    %c0 = arith.constant 0 : index
    %c0_0 = arith.constant 0 : index
    %0 = vector.load %arg1[%c0, %c0_0] : memref<8x32xf32, #tpu.memory_space<vmem>>, vector<8x32xf32>
    %c0_1 = arith.constant 0 : index
    %c0_2 = arith.constant 0 : index
    %1 = vector.load %arg2[%c0_1, %c0_2] : memref<32x64xbf16, #tpu.memory_space<vmem>>, vector<32x64xbf16>
    %c0_3 = arith.constant 0 : index
    %c0_4 = arith.constant 0 : index
    %2 = vector.load %arg3[%c0_3, %c0_4] : memref<1x64xf32, #tpu.memory_space<vmem>>, vector<1x64xf32>
    %3 = arith.truncf %0 : vector<8x32xf32> to vector<8x32xbf16>
    %cst = arith.constant dense<0.000000e+00> : vector<8x64xf32>
    %4 = tpu.matmul %3, %1, %cst {dimension_numbers = #tpu.dot_dimension_numbers<[1], [0], [0], [1], [0, 0, 1, 1], [], []>} : vector<8x32xbf16>, vector<32x64xbf16>, vector<8x64xf32> -> vector<8x64xf32>
    %5 = vector.broadcast %2 : vector<1x64xf32> to vector<8x64xf32>
    %6 = arith.addf %4, %5 : vector<8x64xf32>
    %cst_5 = arith.constant 0.000000e+00 : f32
    %7 = vector.broadcast %cst_5 : f32 to vector<8x64xf32>
    %8 = arith.maximumf %6, %7 : vector<8x64xf32>
    %c0_6 = arith.constant 0 : index
    %c0_7 = arith.constant 0 : index
    %9 = vector.load %arg4[%c0_6, %c0_7] : memref<64x32xbf16, #tpu.memory_space<vmem>>, vector<64x32xbf16>
    %c0_8 = arith.constant 0 : index
    %c0_9 = arith.constant 0 : index
    %10 = vector.load %arg5[%c0_8, %c0_9] : memref<1x32xf32, #tpu.memory_space<vmem>>, vector<1x32xf32>
    %11 = arith.truncf %8 : vector<8x64xf32> to vector<8x64xbf16>
    %cst_10 = arith.constant dense<0.000000e+00> : vector<8x32xf32>
    %12 = tpu.matmul %11, %9, %cst_10 {dimension_numbers = #tpu.dot_dimension_numbers<[1], [0], [0], [1], [0, 0, 1, 1], [], []>} : vector<8x64xbf16>, vector<64x32xbf16>, vector<8x32xf32> -> vector<8x32xf32>
    %13 = vector.broadcast %10 : vector<1x32xf32> to vector<8x32xf32>
    %14 = arith.addf %12, %13 : vector<8x32xf32>
    %15 = math.tanh %14 : vector<8x32xf32>
    %c0_11 = arith.constant 0 : index
    %c0_12 = arith.constant 0 : index
    %16 = vector.load %arg6[%c0_11, %c0_12] : memref<32x16xbf16, #tpu.memory_space<vmem>>, vector<32x16xbf16>
    %c0_13 = arith.constant 0 : index
    %c0_14 = arith.constant 0 : index
    %17 = vector.load %arg7[%c0_13, %c0_14] : memref<1x16xf32, #tpu.memory_space<vmem>>, vector<1x16xf32>
    %18 = arith.truncf %15 : vector<8x32xf32> to vector<8x32xbf16>
    %cst_15 = arith.constant dense<0.000000e+00> : vector<8x16xf32>
    %19 = tpu.matmul %18, %16, %cst_15 {dimension_numbers = #tpu.dot_dimension_numbers<[1], [0], [0], [1], [0, 0, 1, 1], [], []>} : vector<8x32xbf16>, vector<32x16xbf16>, vector<8x16xf32> -> vector<8x16xf32>
    %20 = vector.broadcast %17 : vector<1x16xf32> to vector<8x16xf32>
    %21 = arith.addf %19, %20 : vector<8x16xf32>
    %22 = arith.negf %21 : vector<8x16xf32>
    %23 = math.exp %22 : vector<8x16xf32>
    %cst_16 = arith.constant 1.000000e+00 : f32
    %24 = vector.broadcast %cst_16 : f32 to vector<8x16xf32>
    %25 = arith.addf %24, %23 : vector<8x16xf32>
    %26 = arith.divf %24, %25 : vector<8x16xf32>
    %c0_17 = arith.constant 0 : index
    %c0_18 = arith.constant 0 : index
    %27 = vector.load %arg8[%c0_17, %c0_18] : memref<1x16xf32, #tpu.memory_space<vmem>>, vector<1x16xf32>
    %c0_19 = arith.constant 0 : index
    %c0_20 = arith.constant 0 : index
    %28 = vector.load %arg9[%c0_19, %c0_20] : memref<1x1xf32, #tpu.memory_space<vmem>>, vector<1x1xf32>
    %29 = vector.broadcast %27 : vector<1x16xf32> to vector<8x16xf32>
    %30 = arith.mulf %26, %29 : vector<8x16xf32>
    %cst_21 = arith.constant dense<0.000000e+00> : vector<8xf32>
    %31 = vector.multi_reduction <add>, %30, %cst_21 [1] : vector<8x16xf32> to vector<8xf32>
    %32 = vector.shape_cast %31 : vector<8xf32> to vector<8x1xf32>
    %33 = vector.broadcast %28 : vector<1x1xf32> to vector<8x1xf32>
    %34 = arith.addf %32, %33 : vector<8x1xf32>
    %c0_22 = arith.constant 0 : index
    %c0_23 = arith.constant 0 : index
    %35 = vector.load %arg10[%c0_22, %c0_23] : memref<8x1xf32, #tpu.memory_space<vmem>>, vector<8x1xf32>
    tpu.vector_store %arg10[%c0_22, %c0_23], %34 {strides = array<i32>} : memref<8x1xf32, #tpu.memory_space<vmem>>, vector<8x1xf32>,
    return
  }
  func.func @transform_0(%arg0: i32) -> (i32, i32) {
    %c0_i32 = arith.constant 0 : i32
    %c0_i32_0 = arith.constant 0 : i32
    return %arg0, %c0_i32 : i32, i32
  }
  func.func @transform_1(%arg0: i32) -> (i32, i32) {
    %c0_i32 = arith.constant 0 : i32
    %c0_i32_0 = arith.constant 0 : i32
    %c0_i32_1 = arith.constant 0 : i32
    return %c0_i32, %c0_i32_0 : i32, i32
  }
  func.func @transform_2(%arg0: i32) -> (i32, i32) {
    %c0_i32 = arith.constant 0 : i32
    %c0_i32_0 = arith.constant 0 : i32
    %c0_i32_1 = arith.constant 0 : i32
    return %c0_i32, %c0_i32_0 : i32, i32
  }
  func.func @transform_3(%arg0: i32) -> (i32, i32) {
    %c0_i32 = arith.constant 0 : i32
    %c0_i32_0 = arith.constant 0 : i32
    %c0_i32_1 = arith.constant 0 : i32
    return %c0_i32, %c0_i32_0 : i32, i32
  }
  func.func @transform_4(%arg0: i32) -> (i32, i32) {
    %c0_i32 = arith.constant 0 : i32
    %c0_i32_0 = arith.constant 0 : i32
    %c0_i32_1 = arith.constant 0 : i32
    return %c0_i32, %c0_i32_0 : i32, i32
  }
  func.func @transform_5(%arg0: i32) -> (i32, i32) {
    %c0_i32 = arith.constant 0 : i32
    %c0_i32_0 = arith.constant 0 : i32
    %c0_i32_1 = arith.constant 0 : i32
    return %c0_i32, %c0_i32_0 : i32, i32
  }
  func.func @transform_6(%arg0: i32) -> (i32, i32) {
    %c0_i32 = arith.constant 0 : i32
    %c0_i32_0 = arith.constant 0 : i32
    %c0_i32_1 = arith.constant 0 : i32
    return %c0_i32, %c0_i32_0 : i32, i32
  }
  func.func @transform_7(%arg0: i32) -> (i32, i32) {
    %c0_i32 = arith.constant 0 : i32
    %c0_i32_0 = arith.constant 0 : i32
    %c0_i32_1 = arith.constant 0 : i32
    return %c0_i32, %c0_i32_0 : i32, i32
  }
  func.func @transform_8(%arg0: i32) -> (i32, i32) {
    %c0_i32 = arith.constant 0 : i32
    %c0_i32_0 = arith.constant 0 : i32
    %c0_i32_1 = arith.constant 0 : i32
    return %c0_i32, %c0_i32_0 : i32, i32
  }
  func.func @transform_9(%arg0: i32) -> (i32, i32) {
    %c0_i32 = arith.constant 0 : i32
    %c0_i32_0 = arith.constant 0 : i32
    return %arg0, %c0_i32 : i32, i32
  }
}

</mosaic_0001>

<llo_original>
// kernel: tpu_custom_call.1
$region0: #{tpu_custom_call.1}
  #allocation0 [shape = 'u32[]', space=smem, size = 0x4, offset = 0x4, fixed_abs, tag = 'smem constant byte address 0x4 - core index']
  #allocation1 [shape = 'u32[144,128]{1,0:T(1,128)}', space=vmem, size = 0x12000, scoped, tag = 'internal scratch']
  #allocation2 [shape = 'f32[1,1]{1,0:T(1,128)S(1)}', space=vmem, size = 0x200, scoped, tag = 'scoped memory for tpu_custom_call.1']
  %s0 = inlined_call_operand.vmem [shape: f32[8,32], index: 0, kind: input, shape index: {}]
  %s1 = inlined_call_operand.vmem [shape: bf16[32,64], index: 1, kind: input, shape index: {}]
  %s2 = inlined_call_operand.vmem [shape: f32[1,64], index: 2, kind: input, shape index: {}]
  %s3 = inlined_call_operand.vmem [shape: bf16[64,32], index: 3, kind: input, shape index: {}]
  %s4 = inlined_call_operand.vmem [shape: f32[1,32], index: 4, kind: input, shape index: {}]
  %s5 = inlined_call_operand.vmem [shape: bf16[32,16], index: 5, kind: input, shape index: {}]
  %s6 = inlined_call_operand.vmem [shape: f32[1,16], index: 6, kind: input, shape index: {}]
  %s7 = inlined_call_operand.vmem [shape: f32[1,16], index: 7, kind: input, shape index: {}]
  %s8 = inlined_call_operand.<no memory space> [shape: f32[1,1], index: 8, kind: input, shape index: {}]
  %s9 = inlined_call_operand.vmem [shape: f32[8,1], index: 9, kind: output, shape index: {}]
  %s10 = sld [smem:[#allocation0]]
  $region46: #{tpu_custom_call.1} parent=0
    _
  %s12 = ssub.s32 1, %s10
  %s13 = scalar_select 0, %s12, %s10
  %v14 = vstv %s8
  %15 = vst [vmem:[#allocation2] sm:$0x1] %v14
  // Predicated region
  $region2: #{tpu_custom_call.1} parent=0 // pred_check
    _
  $region3: #{tpu_custom_call.1} parent=0 // pred_check_branch
    %17 = sbr.rel (0) target = $region5
  $region4: #{tpu_custom_call.1} parent=0 // pred_region
    _
  $region5: #{tpu_custom_call.1} parent=0 // pred_fallthru
    _
  // Predicated region
  $region6: #{tpu_custom_call.1} parent=0 // pred_check
    _
  $region7: #{tpu_custom_call.1} parent=0 // pred_check_branch
    %19 = sbr.rel (0) target = $region9
  $region8: #{tpu_custom_call.1} parent=0 // pred_region
    _
  $region9: #{tpu_custom_call.1} parent=0 // pred_fallthru
    _
  // Predicated region
  $region10: #{tpu_custom_call.1} parent=0 // pred_check
    _
  $region11: #{tpu_custom_call.1} parent=0 // pred_check_branch
    %21 = sbr.rel (0) target = $region13
  $region12: #{tpu_custom_call.1} parent=0 // pred_region
    _
  $region13: #{tpu_custom_call.1} parent=0 // pred_fallthru
    _
  // Predicated region
  $region14: #{tpu_custom_call.1} parent=0 // pred_check
    _
  $region15: #{tpu_custom_call.1} parent=0 // pred_check_branch
    %23 = sbr.rel (0) target = $region17
  $region16: #{tpu_custom_call.1} parent=0 // pred_region
    _
  $region17: #{tpu_custom_call.1} parent=0 // pred_fallthru
    _
  // Predicated region
  $region18: #{tpu_custom_call.1} parent=0 // pred_check
    _
  $region19: #{tpu_custom_call.1} parent=0 // pred_check_branch
    %25 = sbr.rel (0) target = $region21
  $region20: #{tpu_custom_call.1} parent=0 // pred_region
    _
  $region21: #{tpu_custom_call.1} parent=0 // pred_fallthru
    _
  // Predicated region
  $region22: #{tpu_custom_call.1} parent=0 // pred_check
    _
  $region23: #{tpu_custom_call.1} parent=0 // pred_check_branch
    %27 = sbr.rel (0) target = $region25
  $region24: #{tpu_custom_call.1} parent=0 // pred_region
    _
  $region25: #{tpu_custom_call.1} parent=0 // pred_fallthru
    _
  // Predicated region
  $region26: #{tpu_custom_call.1} parent=0 // pred_check
    _
  $region27: #{tpu_custom_call.1} parent=0 // pred_check_branch
    %29 = sbr.rel (0) target = $region29
  $region28: #{tpu_custom_call.1} parent=0 // pred_region
    _
  $region29: #{tpu_custom_call.1} parent=0 // pred_fallthru
    _
  // Predicated region
  $region30: #{tpu_custom_call.1} parent=0 // pred_check
    _
  $region31: #{tpu_custom_call.1} parent=0 // pred_check_branch
    %31 = sbr.rel (0) target = $region33
  $region32: #{tpu_custom_call.1} parent=0 // pred_region
    _
  $region33: #{tpu_custom_call.1} parent=0 // pred_fallthru
    _
  // Predicated region
  $region34: #{tpu_custom_call.1} parent=0 // pred_check
    _
  $region35: #{tpu_custom_call.1} parent=0 // pred_check_branch
    %33 = sbr.rel (0) target = $region37
  $region36: #{tpu_custom_call.1} parent=0 // pred_region
    _
  $region37: #{tpu_custom_call.1} parent=0 // pred_fallthru
    _
  %v35 = vld [vmem:[%s0] sm:$0xff]
  %v36 = vld [vmem:[%s1] sm:$0xf]
  %v37 = vld [vmem:[%s1 + $0x4] sm:$0xf]
  %v38 = vld [vmem:[%s1 + $0x8] sm:$0xf]
  %v39 = vld [vmem:[%s1 + $0xc] sm:$0xf]
  %v40 = vld [vmem:[%s2] sm:$0x1]
  %v41 = vpack.c.bf16 %v35, %v35
  %v43 = vlaneseq
  %v44 = vshrl.u32 %v43, 7
  %v45 = vsub.s32 0, %v44
  %v46 = vrot.slane %v40, %v45
  %v52 = vunpack.c.l.b16 %v36
  %v53 = vunpack.c.l.b16 %v37
  %v54 = vunpack.c.l.b16 %v38
  %v55 = vunpack.c.l.b16 %v39
  %v56 = vpack.c.b16 %v53, %v52
  %v57 = vpack.c.b16 %v55, %v54
  %vm60 = vcmask 261120
  %v62 = vsel %vm60, %v41, 0
  %64 = vmatprep.subr.bf16.mxu0 0
  %65 = vmatpush1.bf16.msra.mxu0 0
  %66 = vmatprep.subr.bf16.mxu0 0
  %67 = vmatpush1.bf16.msra.mxu0 0
  %68 = vmatprep.subr.bf16.mxu0 0
  %69 = vmatpush1.bf16.msra.mxu0 0
  %70 = vmatprep.subr.bf16.mxu0 0
  %71 = vmatpush1.bf16.msra.mxu0 0
  %72 = vmatprep.subr.bf16.mxu0 0
  %73 = vmatpush1.bf16.msra.mxu0 0
  %74 = vmatprep.subr.bf16.mxu0 0
  %75 = vmatpush1.bf16.msra.mxu0 0
  %76 = vmatprep.subr.bf16.mxu0 0
  %77 = vmatpush1.bf16.msra.mxu0 %v57
  %78 = vmatprep.subr.bf16.mxu0 0
  %79 = vmatpush1.bf16.msra.mxu0 %v56
  %80 = vmatprep.subr.bf16.mxu0 0
  %81 = vmatpush2.bf16.msra.mxu0 0
  %82 = vmatprep.subr.bf16.mxu0 0
  %83 = vmatpush2.bf16.msra.mxu0 0
  %84 = vmatprep.subr.bf16.mxu0 0
  %85 = vmatpush2.bf16.msra.mxu0 0
  %86 = vmatprep.subr.bf16.mxu0 0
  %87 = vmatpush2.bf16.msra.mxu0 0
  %88 = vmatprep.subr.bf16.mxu0 0
  %89 = vmatpush2.bf16.msra.mxu0 0
  %90 = vmatprep.subr.bf16.mxu0 0
  %91 = vmatpush2.bf16.msra.mxu0 0
  %92 = vmatprep.subr.bf16.mxu0 0
  %93 = vmatpush2.bf16.msra.mxu0 0
  %94 = vmatprep.subr.bf16.mxu0 0
  %95 = vmatpush2.bf16.msra.mxu0 0
  %96 = vmatprep.mubr.bf16.mxu0 0
  %97 = vmatmul.mubr.bf16.gmra.mxu0 %v62
  %v98 = vpop.f32.mrf.mxu0
  %v99 = vadd.f32 %v46, %v98
  %v100 = vpop.f32.mrf.mxu0
  %v101 = vpop.f32.mrf.mxu0
  %v102 = vpop.f32.mrf.mxu0
  %103 = vdwg.mxu0
  %v104 = vmax.f32 %v99, 0.0
  %v105 = vld [vmem:[%s3] sm:$0xf]
  %v106 = vld [vmem:[%s3 + $0x4] sm:$0xf]
  %v107 = vld [vmem:[%s3 + $0x8] sm:$0xf]
  %v108 = vld [vmem:[%s3 + $0xc] sm:$0xf]
  %v109 = vld [vmem:[%s3 + $0x10] sm:$0xf]
  %v110 = vld [vmem:[%s3 + $0x14] sm:$0xf]
  %v111 = vld [vmem:[%s3 + $0x18] sm:$0xf]
  %v112 = vld [vmem:[%s3 + $0x1c] sm:$0xf]
  %v113 = vld [vmem:[%s4] sm:$0x1]
  %v114 = vpack.c.bf16 %v104, %v104
  %v116 = vlaneseq
  %v117 = vshrl.u32 %v116, 7
  %v118 = vsub.s32 0, %v117
  %v119 = vrot.slane %v113, %v118
  %v129 = vunpack.c.l.b16 %v105
  %v130 = vunpack.c.l.b16 %v106
  %v131 = vunpack.c.l.b16 %v107
  %v132 = vunpack.c.l.b16 %v108
  %v133 = vunpack.c.l.b16 %v109
  %v134 = vunpack.c.l.b16 %v110
  %v135 = vunpack.c.l.b16 %v111
  %v136 = vunpack.c.l.b16 %v112
  %v137 = vpack.c.b16 %v130, %v129
  %v138 = vpack.c.b16 %v132, %v131
  %v139 = vpack.c.b16 %v134, %v133
  %v140 = vpack.c.b16 %v136, %v135
  %vm145 = vcmask 523264
  %v147 = vsel %vm145, %v114, 0
  %149 = vmatprep.subr.bf16.mxu0 0
  %150 = vmatpush1.bf16.msra.mxu0 0
  %151 = vmatprep.subr.bf16.mxu0 0
  %152 = vmatpush1.bf16.msra.mxu0 0
  %153 = vmatprep.subr.bf16.mxu0 0
  %154 = vmatpush1.bf16.msra.mxu0 0
  %155 = vmatprep.subr.bf16.mxu0 0
  %156 = vmatpush1.bf16.msra.mxu0 0
  %157 = vmatprep.subr.bf16.mxu0 0
  %158 = vmatpush1.bf16.msra.mxu0 %v140
  %159 = vmatprep.subr.bf16.mxu0 0
  %160 = vmatpush1.bf16.msra.mxu0 %v139
  %161 = vmatprep.subr.bf16.mxu0 0
  %162 = vmatpush1.bf16.msra.mxu0 %v138
  %163 = vmatprep.subr.bf16.mxu0 0
  %164 = vmatpush1.bf16.msra.mxu0 %v137
  %165 = vmatprep.subr.bf16.mxu0 0
  %166 = vmatpush2.bf16.msra.mxu0 0
  %167 = vmatprep.subr.bf16.mxu0 0
  %168 = vmatpush2.bf16.msra.mxu0 0
  %169 = vmatprep.subr.bf16.mxu0 0
  %170 = vmatpush2.bf16.msra.mxu0 0
  %171 = vmatprep.subr.bf16.mxu0 0
  %172 = vmatpush2.bf16.msra.mxu0 0
  %173 = vmatprep.subr.bf16.mxu0 0
  %174 = vmatpush2.bf16.msra.mxu0 0
  %175 = vmatprep.subr.bf16.mxu0 0
  %176 = vmatpush2.bf16.msra.mxu0 0
  %177 = vmatprep.subr.bf16.mxu0 0
  %178 = vmatpush2.bf16.msra.mxu0 0
  %179 = vmatprep.subr.bf16.mxu0 0
  %180 = vmatpush2.bf16.msra.mxu0 0
  %181 = vmatprep.mubr.bf16.mxu0 0
  %182 = vmatmul.mubr.bf16.gmra.mxu0 %v147
  %v183 = vpop.f32.mrf.mxu0
  %v184 = vadd.f32 %v119, %v183
  %v185 = vpop.f32.mrf.mxu0
  %v186 = vpop.f32.mrf.mxu0
  %v187 = vpop.f32.mrf.mxu0
  %188 = vdwg.mxu0
  %v189 = vtanh.pop %v184
  %v190 = vld [vmem:[%s5] sm:$0xf]
  %v191 = vld [vmem:[%s5 + $0x4] sm:$0xf]
  %v192 = vld [vmem:[%s5 + $0x8] sm:$0xf]
  %v193 = vld [vmem:[%s5 + $0xc] sm:$0xf]
  %v194 = vld [vmem:[%s6] sm:$0x1]
  %v195 = vpack.c.bf16 %v189, %v189
  %v197 = vlaneseq
  %v198 = vshrl.u32 %v197, 7
  %v199 = vsub.s32 0, %v198
  %v200 = vrot.slane %v194, %v199
  %v206 = vunpack.c.l.b16 %v190
  %v207 = vunpack.c.l.b16 %v191
  %v208 = vunpack.c.l.b16 %v192
  %v209 = vunpack.c.l.b16 %v193
  %v210 = vpack.c.b16 %v207, %v206
  %v211 = vpack.c.b16 %v209, %v208
  %v215 = vsel %vm60, %v195, 0
  %217 = vmatprep.subr.bf16.mxu0 0
  %218 = vmatpush1.bf16.msra.mxu0 0
  %219 = vmatprep.subr.bf16.mxu0 0
  %220 = vmatpush1.bf16.msra.mxu0 0
  %221 = vmatprep.subr.bf16.mxu0 0
  %222 = vmatpush1.bf16.msra.mxu0 0
  %223 = vmatprep.subr.bf16.mxu0 0
  %224 = vmatpush1.bf16.msra.mxu0 0
  %225 = vmatprep.subr.bf16.mxu0 0
  %226 = vmatpush1.bf16.msra.mxu0 0
  %227 = vmatprep.subr.bf16.mxu0 0
  %228 = vmatpush1.bf16.msra.mxu0 0
  %229 = vmatprep.subr.bf16.mxu0 0
  %230 = vmatpush1.bf16.msra.mxu0 %v211
  %231 = vmatprep.subr.bf16.mxu0 0
  %232 = vmatpush1.bf16.msra.mxu0 %v210
  %233 = vmatprep.subr.bf16.mxu0 0
  %234 = vmatpush2.bf16.msra.mxu0 0
  %235 = vmatprep.subr.bf16.mxu0 0
  %236 = vmatpush2.bf16.msra.mxu0 0
  %237 = vmatprep.subr.bf16.mxu0 0
  %238 = vmatpush2.bf16.msra.mxu0 0
  %239 = vmatprep.subr.bf16.mxu0 0
  %240 = vmatpush2.bf16.msra.mxu0 0
  %241 = vmatprep.subr.bf16.mxu0 0
  %242 = vmatpush2.bf16.msra.mxu0 0
  %243 = vmatprep.subr.bf16.mxu0 0
  %244 = vmatpush2.bf16.msra.mxu0 0
  %245 = vmatprep.subr.bf16.mxu0 0
  %246 = vmatpush2.bf16.msra.mxu0 0
  %247 = vmatprep.subr.bf16.mxu0 0
  %248 = vmatpush2.bf16.msra.mxu0 0
  %249 = vmatprep.mubr.bf16.mxu0 0
  %250 = vmatmul.mubr.bf16.gmra.mxu0 %v215
  %v251 = vpop.f32.mrf.mxu0
  %v252 = vadd.f32 %v200, %v251
  %v253 = vpop.f32.mrf.mxu0
  %v254 = vpop.f32.mrf.mxu0
  %v255 = vpop.f32.mrf.mxu0
  %256 = vdwg.mxu0
  %v257 = vxor.u32 %v252, 2147483648
  %v258 = vmul.f32 %v257, 1.442695
  %v259 = vpow.pop %v258
  %v260 = vadd.f32 %v259, 1.0
  %v261 = vrcp.pop %v260
  %v262 = vmul.f32 1.0, %v261
  %v263 = vld [vmem:[%s7] sm:$0x1]
  %v264 = vld [vmem:[#allocation2] sm:$0x1]
  %v266 = vlaneseq
  %v267 = vshrl.u32 %v266, 7
  %v268 = vsub.s32 0, %v267
  %v269 = vrot.slane %v263, %v268
  %v271 = vmul.f32 %v262, %v269
  %vm272 = vcmask 130048
  %v273 = vsel %vm272, %v271, 0.0
  %274 = vadd.xlane.f32.xlu0 %v273
  %v275 = vpop.xlane.xlu0 %274
  %v277 = vlaneseq
  %v278 = vshrl.u32 %v277, 7
  %v279 = vsub.s32 0, %v278
  %v280 = vrot.slane %v264, %v279
  %v282 = vadd.f32 %v275, %v280
  %vm283 = vcmask 7168
  %284 = vst.msk [vmem:[%s9] sm:$0xff] %vm283, %v282
  // Predicated region
  $region38: #{tpu_custom_call.1} parent=0 // pred_check
    _
  $region39: #{tpu_custom_call.1} parent=0 // pred_check_branch
    %286 = sbr.rel (0) target = $region41
  $region40: #{tpu_custom_call.1} parent=0 // pred_region
    _
  $region41: #{tpu_custom_call.1} parent=0 // pred_fallthru
    _
  // Predicated region
  $region42: #{tpu_custom_call.1} parent=0 // pred_check
    _
  $region43: #{tpu_custom_call.1} parent=0 // pred_check_branch
    %288 = sbr.rel (0) target = $region45
  $region44: #{tpu_custom_call.1} parent=0 // pred_region
    _
  $region45: #{tpu_custom_call.1} parent=0 // pred_fallthru
    _

</llo_original>
